<compile_context>
chip_gen: v7x
topology: tpu7x:2x2x1
jax: 0.10.0
libtpu: 0.0.40
codegen_flags: <defaults>
</compile_context>

<pallas_src>
import math

import jax
import jax.numpy as jnp
from jax.experimental import pallas as pl
from jax.experimental.pallas import tpu as pltpu


def _eca_kernel(x_ref, w_ref, o_ref, acc_ref):
    """x_ref: (Bt, tl, Dr), w_ref: (Dr, Dp), o_ref: (Bt, 1, Dp), acc: (Bt, Dr)."""
    li = pl.program_id(1)

    @pl.when(li == 0)
    def _init():
        acc_ref[...] = jnp.zeros_like(acc_ref)

    # Partial sum over this sequence tile (f32 accumulation).
    acc_ref[...] += jnp.sum(x_ref[...].astype(jnp.float32), axis=1)

    @pl.when(li == pl.num_programs(1) - 1)
    def _finish():
        # One MXU matmul folds lane-unpacking + 1/L mean + banded conv.
        y = jnp.dot(acc_ref[...], w_ref[...],
                    preferred_element_type=jnp.float32)
        o_ref[...] = y[:, None, :].astype(o_ref.dtype)


def eca_forward(x, w, *, tile_bytes=None):
    """x: (B, L, D) float, w: (k,) conv taps (k odd).  Returns (B, 1, D)."""
    B, L, D = map(int, x.shape)
    k = int(w.shape[0])
    pad = k // 2
    itemsize = x.dtype.itemsize
    # Minimum sublane multiple for the tiled (second-to-last) block dim.
    sub = {4: 8, 2: 16, 1: 32}.get(itemsize, 8)

    Dp = ((D + 127) // 128) * 128            # lane-dense, unmasked output width

    # ---- Lane folding: pack r sequence rows into one lane row (free reshape).
    r = 1
    if D < 128:
        r = 128 // math.gcd(D, 128)          # D*r = lcm(D, 128): full lanes
        while r > 1 and (L % r != 0 or D * r * Dp * 4 > (4 << 20)):
            r //= 2                          # r is a power of two
    Lr = L // r
    Dr = D * r
    x_r = x.reshape(B, Lr, Dr)               # pure row-major reshape, no copy

    # ---- Toeplitz W (Dr, Dp): zero-padded cross-correlation + fold + 1/L.
    s_idx = jnp.arange(D)[:, None]
    d_idx = jnp.arange(D)[None, :]
    tap = s_idx - d_idx + pad
    band = jnp.where((tap >= 0) & (tap < k),
                     w.astype(jnp.float32)[jnp.clip(tap, 0, k - 1)], 0.0)
    wc = jnp.zeros((D, Dp), jnp.float32).at[:, :D].set(band)
    wf = jnp.tile(wc, (r, 1)) * jnp.float32(1.0 / L)           # (Dr, Dp)
    w_bytes = Dr * Dp * 4

    # ---- Tile sizing: ~8 MiB of x per grid step, W-size aware.
    row_bytes = Dr * itemsize
    target = int(tile_bytes) if tile_bytes else (8 << 20)
    x_budget = min(target, max(512 << 10, ((36 << 20) - w_bytes) // 2))

    if Lr * row_bytes > x_budget:
        # Long sequences: tile the (folded) sequence, one sample per block.
        Bt = 1
        target_rows = max(sub, (x_budget // row_bytes) // sub * sub)
        # Prefer an exact divisor of Lr (no padding at all).
        best = 0
        i = 1
        while i * i <= Lr:
            if Lr % i == 0:
                for c in (i, Lr // i):
                    if c % sub == 0 and c <= target_rows and c > best:
                        best = c
            i += 1
        if best > 0 and best * row_bytes * 4 >= x_budget:
            tl = best
        else:
            # Zero-pad the folded sequence to a multiple of the target tile.
            # Zeros do not change the sum; W carries the true 1/L factor.
            tl = target_rows
        Lp = pl.cdiv(Lr, tl) * tl
        if Lp != Lr:
            x_r = jnp.pad(x_r, ((0, 0), (0, Lp - Lr), (0, 0)))
    else:
        # Short sequences: whole sequence per block; block the batch axis so
        # every grid step still moves a sizeable chunk of HBM.
        tl = Lr
        Lp = Lr
        per = max(1, tl * row_bytes)
        want = max(1, x_budget // per)
        if B >= 2:
            want = min(want, B // 2)         # keep >=2 batch blocks (megacore)
        want = min(want, B)
        Bt = 1
        for d in range(1, want + 1):         # largest divisor of B <= want
            if B % d == 0:
                Bt = d

    nb = B // Bt
    nl = Lp // tl                            # exact: every block is full

    # ---- VMEM footprint -> raise the scoped limit only when needed.
    lanes = ((Dr + 127) // 128) * 128
    x_block_bytes = Bt * tl * lanes * itemsize
    out_block_bytes = Bt * Dp * itemsize
    acc_bytes = Bt * Dr * 4
    vmem_need = (2 * x_block_bytes + w_bytes + 2 * out_block_bytes
                 + acc_bytes + (1 << 20))
    cp_kwargs = dict(dimension_semantics=("parallel", "arbitrary"))
    if vmem_need > (14 << 20):
        cp_kwargs["vmem_limit_bytes"] = int(
            min(max(vmem_need * 5 // 4, 16 << 20), 56 << 20))

    out = pl.pallas_call(
        _eca_kernel,
        out_shape=jax.ShapeDtypeStruct((B, 1, Dp), x.dtype),
        grid_spec=pltpu.PrefetchScalarGridSpec(
            num_scalar_prefetch=0,
            grid=(nb, nl),
            in_specs=[
                # x tile: new block per (b, l) grid step -> pipelined DMA.
                pl.BlockSpec((Bt, tl, Dr), lambda b, l: (b, l, 0)),
                # conv matrix: constant block index -> loaded once, resident.
                pl.BlockSpec((Dr, Dp), lambda b, l: (0, 0)),
            ],
            # Output block constant across the reduction axis (written once).
            out_specs=pl.BlockSpec((Bt, 1, Dp), lambda b, l: (b, 0, 0)),
            scratch_shapes=[pltpu.VMEM((Bt, Dr), jnp.float32)],
        ),
        compiler_params=pltpu.CompilerParams(**cp_kwargs),
        cost_estimate=pl.CostEstimate(
            flops=int(B * L * D + 2 * B * Dr * Dp),
            transcendentals=0,
            bytes_accessed=int(B * L * D * itemsize + w_bytes
                               + B * Dp * itemsize),
        ),
    )(x_r, wf)

    return out[..., :D]


def _eca_reference(x, w):
    """Plain-JAX reference of the PyTorch ECAnet forward."""
    k = int(w.shape[0])
    pad = k // 2
    D = x.shape[-1]
    pooled = x.mean(axis=1)                                    # (B, D)
    pooled_p = jnp.pad(pooled, ((0, 0), (pad, pad)))
    y = sum(w[j] * pooled_p[:, j:j + D] for j in range(k))
    return y[:, None, :]


if __name__ == "__main__":
    def eca_k(D, gamma=2, b=1):
        t = int(abs((math.log(D, 2) + b) / gamma))
        return t if t % 2 else t + 1

    key = jax.random.PRNGKey(0)
    cases = [
        # (B, L, D, tile_bytes) -- module config: D = n_features = 32, k = 3.
        (2, 8, 32, None),     # tiny, batch-parallel path (Bt = 1)
        (4, 8, 32, None),     # batch-blocked path (Bt = 2)
        (2, 100, 48, 4096),   # forced small tiles: multi-tile sequence
                              # reduction + zero-pad fallback + general fold
    ]
    for (B, L, D, tb) in cases:
        key, kx, kw = jax.random.split(key, 3)
        k = eca_k(D)
        x = jax.random.normal(kx, (B, L, D), jnp.float32)
        # Conv1d(1, 1, k, bias=False) weight (torch (1,1,k) -> flat (k,)),
        # default kaiming-uniform style bound 1/sqrt(fan_in).
        limit = 1.0 / math.sqrt(k)
        w = jax.random.uniform(kw, (k,), jnp.float32, -limit, limit)

        out = eca_forward(x, w, tile_bytes=tb)
        jax.block_until_ready(out)
        ref = _eca_reference(x, w)

        assert out.shape == (B, 1, D), (out.shape, (B, 1, D))
        err = float(jnp.max(jnp.abs(out - ref)))
        assert err < 1e-4, (B, L, D, err)

    print("KERNEL_OK")
</pallas_src>

<mosaic_0001>
module attributes {stable_mosaic.version = 11 : i64} {
  func.func @_eca_kernel(%arg0: i32, %arg1: i32, %arg2: memref<1x2x128xf32, #tpu.memory_space<vmem>>, %arg3: memref<128x128xf32, #tpu.memory_space<vmem>>, %arg4: memref<1x1x128xf32, #tpu.memory_space<vmem>>, %arg5: memref<1x128xf32, #tpu.memory_space<vmem>>) attributes {dimension_semantics = [#tpu.dimension_semantics<parallel>, #tpu.dimension_semantics<arbitrary>], iteration_bounds = array<i64: 2, 1>, scalar_prefetch = 0 : i64, scratch_operands = 1 : i64, tpu.core_type = #tpu.core_type<tc>, window_params = [{transform_indices = @transform_0, window_bounds = array<i64: 1, 2, 128>}, {pipeline_mode = #tpu.pipeline_mode<synchronous>, transform_indices = @transform_1, window_bounds = array<i64: 128, 128>}, {transform_indices = @transform_2, window_bounds = array<i64: 1, 1, 128>}]} {
    %c0_i32 = arith.constant 0 : i32
    %0 = arith.cmpi eq, %arg1, %c0_i32 : i32
    %1 = arith.extui %0 : i1 to i32
    %c0_i32_0 = arith.constant 0 : i32
    %2 = arith.cmpi ne, %1, %c0_i32_0 : i32
    scf.if %2 {
      %cst_9 = arith.constant 0.000000e+00 : f32
      %11 = vector.broadcast %cst_9 : f32 to vector<1x128xf32>
      %c0_10 = arith.constant 0 : index
      %c0_11 = arith.constant 0 : index
      %12 = vector.load %arg5[%c0_10, %c0_11] : memref<1x128xf32, #tpu.memory_space<vmem>>, vector<1x128xf32>
      tpu.vector_store %arg5[%c0_10, %c0_11], %11 {strides = array<i32>} : memref<1x128xf32, #tpu.memory_space<vmem>>, vector<1x128xf32>,
    } else {
    }
    %c0 = arith.constant 0 : index
    %c0_1 = arith.constant 0 : index
    %3 = vector.load %arg5[%c0, %c0_1] : memref<1x128xf32, #tpu.memory_space<vmem>>, vector<1x128xf32>
    %c0_2 = arith.constant 0 : index
    %c0_3 = arith.constant 0 : index
    %c0_4 = arith.constant 0 : index
    %4 = vector.load %arg2[%c0_2, %c0_3, %c0_4] : memref<1x2x128xf32, #tpu.memory_space<vmem>>, vector<1x2x128xf32>
    %cst = arith.constant dense<0.000000e+00> : vector<1x128xf32>
    %5 = vector.multi_reduction <add>, %4, %cst [1] : vector<1x2x128xf32> to vector<1x128xf32>
    %6 = arith.addf %3, %5 : vector<1x128xf32>
    %c0_5 = arith.constant 0 : index
    %c0_6 = arith.constant 0 : index
    %7 = vector.load %arg5[%c0_5, %c0_6] : memref<1x128xf32, #tpu.memory_space<vmem>>, vector<1x128xf32>
    tpu.vector_store %arg5[%c0_5, %c0_6], %6 {strides = array<i32>} : memref<1x128xf32, #tpu.memory_space<vmem>>, vector<1x128xf32>,
    %c0_i32_7 = arith.constant 0 : i32
    %8 = arith.cmpi eq, %arg1, %c0_i32_7 : i32
    %9 = arith.extui %8 : i1 to i32
    %c0_i32_8 = arith.constant 0 : i32
    %10 = arith.cmpi ne, %9, %c0_i32_8 : i32
    scf.if %10 {
      %c0_9 = arith.constant 0 : index
      %c0_10 = arith.constant 0 : index
      %11 = vector.load %arg5[%c0_9, %c0_10] : memref<1x128xf32, #tpu.memory_space<vmem>>, vector<1x128xf32>
      %c0_11 = arith.constant 0 : index
      %c0_12 = arith.constant 0 : index
      %12 = vector.load %arg3[%c0_11, %c0_12] : memref<128x128xf32, #tpu.memory_space<vmem>>, vector<128x128xf32>
      %cst_13 = arith.constant dense<0.000000e+00> : vector<1x128xf32>
      %13 = tpu.matmul %11, %12, %cst_13 {dimension_numbers = #tpu.dot_dimension_numbers<[1], [0], [0], [1], [0, 0, 1, 1], [], []>} : vector<1x128xf32>, vector<128x128xf32>, vector<1x128xf32> -> vector<1x128xf32>
      %14 = vector.shape_cast %13 : vector<1x128xf32> to vector<1x1x128xf32>
      %c0_14 = arith.constant 0 : index
      %c0_15 = arith.constant 0 : index
      %c0_16 = arith.constant 0 : index
      %15 = vector.load %arg4[%c0_14, %c0_15, %c0_16] : memref<1x1x128xf32, #tpu.memory_space<vmem>>, vector<1x1x128xf32>
      tpu.vector_store %arg4[%c0_14, %c0_15, %c0_16], %14 {strides = array<i32>} : memref<1x1x128xf32, #tpu.memory_space<vmem>>, vector<1x1x128xf32>,
    } else {
    }
    return
  }
  func.func @transform_0(%arg0: i32, %arg1: i32) -> (i32, i32, i32) {
    %c0_i32 = arith.constant 0 : i32
    %c0_i32_0 = arith.constant 0 : i32
    return %arg0, %arg1, %c0_i32 : i32, i32, i32
  }
  func.func @transform_1(%arg0: i32, %arg1: i32) -> (i32, i32) {
    %c0_i32 = arith.constant 0 : i32
    %c0_i32_0 = arith.constant 0 : i32
    %c0_i32_1 = arith.constant 0 : i32
    return %c0_i32, %c0_i32_0 : i32, i32
  }
  func.func @transform_2(%arg0: i32, %arg1: i32) -> (i32, i32, i32) {
    %c0_i32 = arith.constant 0 : i32
    %c0_i32_0 = arith.constant 0 : i32
    %c0_i32_1 = arith.constant 0 : i32
    return %arg0, %c0_i32, %c0_i32_0 : i32, i32, i32
  }
}

</mosaic_0001>

<llo_original>
// kernel: tpu_custom_call.1
$region0: #{tpu_custom_call.1}
  #allocation0 [shape = 'u32[]', space=smem, size = 0x4, offset = 0x4, fixed_abs, tag = 'smem constant byte address 0x4 - core index']
  #allocation1 [shape = 'u32[144,128]{1,0:T(1,128)}', space=vmem, size = 0x12000, scoped, tag = 'internal scratch']
  #allocation2 [shape = 'f32[1,128]{1,0:T(1,128)}', space=vmem, size = 0x200, scoped, tag = 'scratch operand']
  %s0 = inlined_call_operand.hbm [shape: f32[2,2,128], index: 0, kind: input, shape index: {}]
  %s1 = inlined_call_operand.hbm [shape: f32[128,128], index: 1, kind: input, shape index: {}]
  %s2 = inlined_call_operand.hbm [shape: f32[2,1,128], index: 2, kind: output, shape index: {}]
  %s3 = sld [smem:[#allocation0]]
  $region57: #{tpu_custom_call.1} parent=0
    _
  %s5 = ssub.s32 1, %s3
  %s6 = scalar_select 0, %s5, %s3
  $region1: #{tpu_custom_call.1} parent=0
    #allocation3 [shape = 'u8[2048]{0}', space=vmem, size = 0x800, scoped, tag = 'input window, operand 0']
    #allocation4 [shape = 's32[2]{0}', space=sflag, size = 0x8, scoped, tag = 'scoped memory for tpu_custom_call.1']
    #allocation5 [shape = 's32[2]{0}', space=sflag, size = 0x8, scoped, tag = 'scoped memory for tpu_custom_call.1']
    #allocation6 [shape = 'u8[65536]{0}', space=vmem, size = 0x10000, scoped, tag = 'input window, operand 1, single buffered']
    #allocation7 [shape = 's32[1]{0}', space=sflag, size = 0x4, scoped, tag = 'scoped memory for tpu_custom_call.1']
    #allocation8 [shape = 'u8[1024]{0}', space=vmem, size = 0x400, scoped, tag = 'output window, operand 0']
    %7 = vsyncpa [#allocation4], 0
    %s8 = scalar_lea.sflag [#allocation4], 1
    %9 = vsyncpa %s8, 0
    %10 = vsyncpa [#allocation7], 0
    %11 = vsyncpa [#allocation5], 0
    %s12 = scalar_lea.sflag [#allocation5], 1
    %13 = vsyncpa %s12, 0
    loop: start=0, step=1, limit=4
    $region2: #{tpu_custom_call.1} parent=1 // loop_pre_header
      _
    $region3: #{tpu_custom_call.1} parent=1 // loop_header
      %s15 = sphi 0, %s19
      %p16 = scmp.ge.s32.totalorder %s15, 4
      %s22 = sphi 0, %s34
      %s23 = sphi 0, %s30
      %s24 = sphi 0, %s22
      %s25 = sphi 0, %s23
      %s26 = sphi 0, %s24
      %s27 = sphi 0, %s25
      %s39 = sphi 0, %s41
      %s42 = sphi 0, %s39
      %s43 = sphi 0, %s42
      %s59 = sphi 0, %s43
      %s63 = sphi 0, %s63
      %s65 = sphi 0, %s63
      %s66 = sphi 0, %s65
      %s80 = sphi 0, %s66
      %s86 = sphi 0, %s88
      %s89 = sphi 0, %s86
      %s90 = sphi 0, %s89
      %s106 = sphi 0, %s90
    $region4: #{tpu_custom_call.1} parent=1 // loop_header_branch
      %18 = sbr.rel (%p16) target = $region8
    $region5: #{tpu_custom_call.1} parent=1 // loop_body
      %s20 = ssub.s32 %s15, 1
      %s21 = ssub.s32 %s15, 2
      %s28 = sadd.s32 1, %s23
      %p29 = scmp.ge.s32.totalorder %s28, 1
      %s30 = scalar_select %p29, 0, %s28
      %s31 = sadd.s32 1, %s22
      %s32 = scalar_select %p29, %s31, %s22
      %p33 = scmp.ge.s32.totalorder %s32, 2
      %s34 = scalar_select %p33, 0, %s32
      %s35 = ssub.s32 %s22, %s34
      %s36 = ssub.s32 %s23, %s30
      %s37 = sor.u32 %s35, %s36
      %p38 = scmp.eq.s32.totalorder %s37, 0
      %s40 = sadd.s32 %s39, 1
      %s41 = scalar_select %p38, %s39, %s40
      %p44 = pneg %p38
      %p45 = scmp.eq.s32.totalorder %s15, 1
      %p46 = por %p44, %p45
      %p47 = scmp.ne.s32.totalorder %s39, %s42
      %p48 = scmp.eq.s32.totalorder %s15, 0
      %p49 = por %p47, %p48
      %p50 = scmp.ne.s32.totalorder %s39, %s42
      %p51 = scmp.eq.s32.totalorder %s20, 1
      %p52 = por %p50, %p51
      %p53 = scmp.ne.s32.totalorder %s42, %s43
      %p54 = scmp.eq.s32.totalorder %s20, 0
      %p55 = por %p53, %p54
      %p56 = scmp.ne.s32.totalorder %s42, %s43
      %p57 = scmp.eq.s32.totalorder %s21, 1
      %p58 = por %p56, %p57
      %p60 = scmp.ne.s32.totalorder %s43, %s59
      %p61 = scmp.eq.s32.totalorder %s21, 0
      %p62 = por %p60, %p61
      %s64 = sadd.s32 %s63, 1
      %p67 = scmp.eq.s32.totalorder %s15, 1
      %p68 = scmp.ne.s32.totalorder %s63, %s65
      %p69 = scmp.eq.s32.totalorder %s15, 0
      %p70 = por %p68, %p69
      %p71 = scmp.ne.s32.totalorder %s63, %s65
      %p72 = scmp.eq.s32.totalorder %s20, 1
      %p73 = por %p71, %p72
      %p74 = scmp.ne.s32.totalorder %s65, %s66
      %p75 = scmp.eq.s32.totalorder %s20, 0
      %p76 = por %p74, %p75
      %p77 = scmp.ne.s32.totalorder %s65, %s66
      %p78 = scmp.eq.s32.totalorder %s21, 1
      %p79 = por %p77, %p78
      %p81 = scmp.ne.s32.totalorder %s66, %s80
      %p82 = scmp.eq.s32.totalorder %s21, 0
      %p83 = por %p81, %p82
      %s84 = ssub.s32 %s22, %s34
      %p85 = scmp.eq.s32.totalorder %s84, 0
      %s87 = sadd.s32 %s86, 1
      %s88 = scalar_select %p85, %s86, %s87
      %p91 = pneg %p85
      %p92 = scmp.eq.s32.totalorder %s15, 1
      %p93 = por %p91, %p92
      %p94 = scmp.ne.s32.totalorder %s86, %s89
      %p95 = scmp.eq.s32.totalorder %s15, 0
      %p96 = por %p94, %p95
      %p97 = scmp.ne.s32.totalorder %s86, %s89
      %p98 = scmp.eq.s32.totalorder %s20, 1
      %p99 = por %p97, %p98
      %p100 = scmp.ne.s32.totalorder %s89, %s90
      %p101 = scmp.eq.s32.totalorder %s20, 0
      %p102 = por %p100, %p101
      %p103 = scmp.ne.s32.totalorder %s89, %s90
      %p104 = scmp.eq.s32.totalorder %s21, 1
      %p105 = por %p103, %p104
      %p107 = scmp.ne.s32.totalorder %s90, %s106
      %p108 = scmp.eq.s32.totalorder %s21, 0
      %p109 = por %p107, %p108
      %p110 = scmp.le.s32.totalorder 1, %s15
      %p111 = scmp.lt.s32.totalorder %s15, 3
      %p112 = pnand %p110, %p111
      %p113 = pneg %p112
      // Predicated region
      $region9: #{tpu_custom_call.1} parent=5 // pred_check
        _
      $region10: #{tpu_custom_call.1} parent=5 // pred_check_branch
        %115 = sbr.rel (%p112) target = $region12
      $region11: #{tpu_custom_call.1} parent=5 // pred_region
        %s116 = ssub.s32 %s15, 1
        // Predicated region
        $region13: #{tpu_custom_call.1} parent=11 // pred_check
          %p117 = pneg %p76
        $region14: #{tpu_custom_call.1} parent=11 // pred_check_branch
          %119 = sbr.rel (%p117) target = $region16
        $region15: #{tpu_custom_call.1} parent=11 // pred_region
          %s121 = ssub.s32 2048, 2048
          %122 = vsyncadd [#allocation7], %s121
          %s123 = sshll.u32 [#allocation6], 4
          %s124 = int_to_ptr.vmem [resolvable:$true] %s123
          %129 = dma.hbm_to_vmem [thread:$0]  %s1, 2048, %s124, [#allocation7], 128, 128, 8
        $region16: #{tpu_custom_call.1} parent=11 // pred_fallthru
          _
      $region12: #{tpu_custom_call.1} parent=5 // pred_fallthru
        _
      %p130 = scmp.lt.s32.totalorder %s15, 2
      // Predicated region
      $region17: #{tpu_custom_call.1} parent=5 // pred_check
        %p131 = pneg %p130
      $region18: #{tpu_custom_call.1} parent=5 // pred_check_branch
        %133 = sbr.rel (%p131) target = $region20
      $region19: #{tpu_custom_call.1} parent=5 // pred_region
        // Predicated region
        $region21: #{tpu_custom_call.1} parent=19 // pred_check
          %p134 = pneg %p49
        $region22: #{tpu_custom_call.1} parent=19 // pred_check_branch
          %136 = sbr.rel (%p134) target = $region24
        $region23: #{tpu_custom_call.1} parent=19 // pred_region
          %s137 = sand.u32 %s39, 1
          %s138 = scalar_lea.sflag [#allocation4], %s137
          %s139 = sand.u32 %s39, 1
          %s140 = smul.addr %s139, 2
          %s141 = scalar_lea.vmem [#allocation3], %s140
          %s143 = ssub.s32 32, 32
          %144 = vsyncadd %s138, %s143
          %s145 = sadd.s32 %s23, %s22
          %s146 = smul.addr %s145, 32
          %s147 = scalar_lea.hbm %s0, %s146
          %s149 = sshll.u32 %s141, 4
          %s150 = int_to_ptr.vmem [resolvable:$true] %s149
          %152 = dma.hbm_to_vmem [thread:$0]  %s147, 32, %s150, %s138
        $region24: #{tpu_custom_call.1} parent=19 // pred_fallthru
          _
      $region20: #{tpu_custom_call.1} parent=5 // pred_fallthru
        _
      %p153 = scmp.le.s32.totalorder 1, %s15
      %p154 = scmp.lt.s32.totalorder %s15, 3
      %p155 = pnand %p153, %p154
      %p156 = pneg %p155
      // Predicated region
      $region25: #{tpu_custom_call.1} parent=5 // pred_check
        _
      $region26: #{tpu_custom_call.1} parent=5 // pred_check_branch
        %158 = sbr.rel (%p155) target = $region28
      $region27: #{tpu_custom_call.1} parent=5 // pred_region
        %s159 = ssub.s32 %s15, 1
        %s160 = sand.u32 %s42, 1
        %s161 = scalar_lea.sflag [#allocation4], %s160
        %s162 = sand.u32 %s42, 1
        %s163 = smul.addr %s162, 2
        %s164 = scalar_lea.vmem [#allocation3], %s163
        // Predicated region
        $region29: #{tpu_custom_call.1} parent=27 // pred_check
          %p165 = pneg %p55
        $region30: #{tpu_custom_call.1} parent=27 // pred_check_branch
          %167 = sbr.rel (%p165) target = $region32
        $region31: #{tpu_custom_call.1} parent=27 // pred_region
          %168 = dma.done %s161, 32
        $region32: #{tpu_custom_call.1} parent=27 // pred_fallthru
          _
        // Predicated region
        $region33: #{tpu_custom_call.1} parent=27 // pred_check
          %p169 = pneg %p76
        $region34: #{tpu_custom_call.1} parent=27 // pred_check_branch
          %171 = sbr.rel (%p169) target = $region36
        $region35: #{tpu_custom_call.1} parent=27 // pred_region
          %172 = dma.done [#allocation7], 2048
        $region36: #{tpu_custom_call.1} parent=27 // pred_fallthru
          _
        %s173 = sand.u32 %s42, 1
        %s174 = scalar_lea.sflag [#allocation4], %s173
        %s175 = sand.u32 %s42, 1
        %s176 = smul.addr %s175, 2
        %s177 = scalar_lea.vmem [#allocation3], %s176
        %p178 = pneg %p55
        %p179 = pneg %p52
        %p180 = pneg %p76
        %p181 = pneg %p73
        %p182 = pneg %p102
        %p183 = pneg %p99
        %s184 = sand.u32 %s89, 1
        %s185 = scalar_lea.sflag [#allocation5], %s184
        %s186 = sand.u32 %s89, 1
        %s187 = scalar_lea.vmem [#allocation8], %s186
        %p188 = scmp.eq.s32.totalorder %s25, 0
        // Predicated region
        $region37: #{tpu_custom_call.1} parent=27 // pred_check
          %p189 = pneg %p188
        $region38: #{tpu_custom_call.1} parent=27 // pred_check_branch
          %191 = sbr.rel (%p189) target = $region40
        $region39: #{tpu_custom_call.1} parent=27 // pred_region
          %192 = vst [vmem:[#allocation2] sm:$0x1] 0.0
        $region40: #{tpu_custom_call.1} parent=27 // pred_fallthru
          _
        %v193 = vld [vmem:[#allocation2] sm:$0x1]
        %v194 = vld [vmem:[%s164] sm:$0x3]
        %vm195 = vcmask 1041408
        %v196 = vsel %vm195, %v194, 0.0
        %v197 = vrot.slane %v196, 4
        %v198 = vadd.f32 %v196, %v197
        %v199 = vrot.slane %v198, 2
        %v200 = vadd.f32 %v198, %v199
        %v201 = vrot.slane %v200, 1
        %v202 = vadd.f32 %v200, %v201
        %v203 = vadd.f32 %v193, %v202
        %204 = vst [vmem:[#allocation2] sm:$0x1] %v203
        // Predicated region
        $region41: #{tpu_custom_call.1} parent=27 // pred_check
          %p205 = pneg %p188
        $region42: #{tpu_custom_call.1} parent=27 // pred_check_branch
          %207 = sbr.rel (%p205) target = $region44
        $region43: #{tpu_custom_call.1} parent=27 // pred_region
          %v208 = vld [vmem:[#allocation2] sm:$0x1]
          %v209 = vld [vmem:[#allocation6] sm:$0xff]
          %v210 = vld [vmem:[#allocation6 + $0x8] sm:$0xff]
          %v211 = vld [vmem:[#allocation6 + $0x10] sm:$0xff]
          %v212 = vld [vmem:[#allocation6 + $0x18] sm:$0xff]
          %v213 = vld [vmem:[#allocation6 + $0x20] sm:$0xff]
          %v214 = vld [vmem:[#allocation6 + $0x28] sm:$0xff]
          %v215 = vld [vmem:[#allocation6 + $0x30] sm:$0xff]
          %v216 = vld [vmem:[#allocation6 + $0x38] sm:$0xff]
          %v217 = vld [vmem:[#allocation6 + $0x40] sm:$0xff]
          %v218 = vld [vmem:[#allocation6 + $0x48] sm:$0xff]
          %v219 = vld [vmem:[#allocation6 + $0x50] sm:$0xff]
          %v220 = vld [vmem:[#allocation6 + $0x58] sm:$0xff]
          %v221 = vld [vmem:[#allocation6 + $0x60] sm:$0xff]
          %v222 = vld [vmem:[#allocation6 + $0x68] sm:$0xff]
          %v223 = vld [vmem:[#allocation6 + $0x70] sm:$0xff]
          %v224 = vld [vmem:[#allocation6 + $0x78] sm:$0xff]
          %225 = vmatprep.subr.mxu0 0.0
          %226 = vmatpush1.msra.mxu0 %v209
          %227 = vmatprep.subr.mxu0 0.0
          %228 = vmatpush1.msra.mxu0 %v210
          %229 = vmatprep.subr.mxu0 0.0
          %230 = vmatpush1.msra.mxu0 %v211
          %231 = vmatprep.subr.mxu0 0.0
          %232 = vmatpush1.msra.mxu0 %v212
          %233 = vmatprep.subr.mxu0 0.0
          %234 = vmatpush1.msra.mxu0 %v213
          %235 = vmatprep.subr.mxu0 0.0
          %236 = vmatpush1.msra.mxu0 %v214
          %237 = vmatprep.subr.mxu0 0.0
          %238 = vmatpush1.msra.mxu0 %v215
          %239 = vmatprep.subr.mxu0 0.0
          %240 = vmatpush1.msra.mxu0 %v216
          %241 = vmatprep.subr.mxu0 0.0
          %242 = vmatpush1.msra.mxu0 %v217
          %243 = vmatprep.subr.mxu0 0.0
          %244 = vmatpush1.msra.mxu0 %v218
          %245 = vmatprep.subr.mxu0 0.0
          %246 = vmatpush1.msra.mxu0 %v219
          %247 = vmatprep.subr.mxu0 0.0
          %248 = vmatpush1.msra.mxu0 %v220
          %249 = vmatprep.subr.mxu0 0.0
          %250 = vmatpush1.msra.mxu0 %v221
          %251 = vmatprep.subr.mxu0 0.0
          %252 = vmatpush1.msra.mxu0 %v222
          %253 = vmatprep.subr.mxu0 0.0
          %254 = vmatpush1.msra.mxu0 %v223
          %255 = vmatprep.subr.mxu0 0.0
          %256 = vmatpush1.msra.mxu0 %v224
          %257 = vmatprep.subr.mxu0 0.0
          %258 = vmatpush1.msra.mxu0 0.0
          %259 = vmatprep.subr.mxu0 0.0
          %260 = vmatpush1.msra.mxu0 0.0
          %261 = vmatprep.subr.mxu0 0.0
          %262 = vmatpush1.msra.mxu0 0.0
          %263 = vmatprep.subr.mxu0 0.0
          %264 = vmatpush1.msra.mxu0 0.0
          %265 = vmatprep.subr.mxu0 0.0
          %266 = vmatpush1.msra.mxu0 0.0
          %267 = vmatprep.subr.mxu0 0.0
          %268 = vmatpush1.msra.mxu0 0.0
          %269 = vmatprep.subr.mxu0 0.0
          %270 = vmatpush1.msra.mxu0 0.0
          %271 = vmatprep.subr.mxu0 0.0
          %272 = vmatpush1.msra.mxu0 0.0
          %273 = vmatprep.subr.mxu0 0.0
          %274 = vmatpush1.msra.mxu0 0.0
          %275 = vmatprep.subr.mxu0 0.0
          %276 = vmatpush1.msra.mxu0 0.0
          %277 = vmatprep.subr.mxu0 0.0
          %278 = vmatpush1.msra.mxu0 0.0
          %279 = vmatprep.subr.mxu0 0.0
          %280 = vmatpush1.msra.mxu0 0.0
          %281 = vmatprep.subr.mxu0 0.0
          %282 = vmatpush1.msra.mxu0 0.0
          %283 = vmatprep.subr.mxu0 0.0
          %284 = vmatpush1.msra.mxu0 0.0
          %285 = vmatprep.subr.mxu0 0.0
          %286 = vmatpush1.msra.mxu0 0.0
          %287 = vmatprep.subr.mxu0 0.0
          %288 = vmatpush1.msra.mxu0 0.0
          %289 = vmatprep.mubr.f32.mxu0 0.0
          %290 = vmatmul.mubr.f32.gmra.mrb[0].mxu0 %v208
          %v291 = vpop.f32.mrb[0].mxu0
          %v292 = vadd.f32 0.0, %v291
          %v293 = vpop.f32.mrb[0].mxu0
          %294 = vdwg.mxu0
          %295 = vst [vmem:[%s187] sm:$0x1] %v292
        $region44: #{tpu_custom_call.1} parent=27 // pred_fallthru
          _
        %s296 = sand.u32 %s89, 1
        %s297 = scalar_lea.sflag [#allocation5], %s296
        %s298 = sand.u32 %s89, 1
        %s299 = scalar_lea.vmem [#allocation8], %s298
        // Predicated region
        $region45: #{tpu_custom_call.1} parent=27 // pred_check
          %p300 = pneg %p99
        $region46: #{tpu_custom_call.1} parent=27 // pred_check_branch
          %302 = sbr.rel (%p300) target = $region48
        $region47: #{tpu_custom_call.1} parent=27 // pred_region
          %s304 = ssub.s32 16, 16
          %305 = vsyncadd %s297, %s304
          %s306 = smul.addr %s24, 16
          %s307 = scalar_lea.hbm %s2, %s306
          %s309 = sshll.u32 %s299, 4
          %s310 = int_to_ptr.vmem [resolvable:$true] %s309
          %312 = dma.vmem_to_hbm [thread:$0]  %s310, 16, %s307, %s297
        $region48: #{tpu_custom_call.1} parent=27 // pred_fallthru
          _
      $region28: #{tpu_custom_call.1} parent=5 // pred_fallthru
        _
      %p313 = scmp.le.s32.totalorder 2, %s15
      // Predicated region
      $region49: #{tpu_custom_call.1} parent=5 // pred_check
        %p314 = pneg %p313
      $region50: #{tpu_custom_call.1} parent=5 // pred_check_branch
        %316 = sbr.rel (%p314) target = $region52
      $region51: #{tpu_custom_call.1} parent=5 // pred_region
        %s317 = ssub.s32 %s15, 2
        // Predicated region
        $region53: #{tpu_custom_call.1} parent=51 // pred_check
          %p318 = pneg %p105
        $region54: #{tpu_custom_call.1} parent=51 // pred_check_branch
          %320 = sbr.rel (%p318) target = $region56
        $region55: #{tpu_custom_call.1} parent=51 // pred_region
          %s321 = sand.u32 %s90, 1
          %s322 = scalar_lea.sflag [#allocation5], %s321
          %s323 = sand.u32 %s90, 1
          %s324 = scalar_lea.vmem [#allocation8], %s323
          %325 = dma.done %s322, 16
        $region56: #{tpu_custom_call.1} parent=51 // pred_fallthru
          _
      $region52: #{tpu_custom_call.1} parent=5 // pred_fallthru
        _
    $region6: #{tpu_custom_call.1} parent=1 // loop_footer
      %s19 = sadd.s32 1, %s15
    $region7: #{tpu_custom_call.1} parent=1 // loop_footer_branch
      %14 = sbr.rel target = $region3
    $region8: #{tpu_custom_call.1} parent=1 // loop_exit
      _
    %326 = vsyncpa [#allocation4], 1
    %s327 = scalar_lea.sflag [#allocation4], 1
    %328 = vsyncpa %s327, 1
    %329 = vsyncpa [#allocation7], 1
    %330 = vsyncpa [#allocation5], 1
    %s331 = scalar_lea.sflag [#allocation5], 1
    %332 = vsyncpa %s331, 1

</llo_original>
